<compile_context>
chip_gen: v7x
topology: tpu7x:2x2x1
jax: 0.10.0
libtpu: 0.0.40
codegen_flags: <defaults>
</compile_context>

<pallas_src>
import functools

import jax
import jax.numpy as jnp
from jax.experimental import pallas as pl
from jax.experimental.pallas import tpu as pltpu


def _affine_kernel(x_ref, scale_ref, shift_ref, o_ref):
    # scale_ref / shift_ref are either (tr, 1) (row path) or (1, tl)
    # (flattened path); jnp broadcasting covers both.
    x = x_ref[...].astype(jnp.float32)
    o_ref[...] = (x * scale_ref[...] + shift_ref[...]).astype(o_ref.dtype)


def _round_down(x, m):
    return (x // m) * m


def _sublane_align(dtype):
    # 8 sublanes for 4-byte dtypes, 16 for bf16/f16, 32 for int8/fp8.
    return max(8, 32 // jnp.dtype(dtype).itemsize)


@functools.partial(jax.jit, static_argnames=("block_bytes",))
def frozen_batch_norm_2d(x, weight, bias, running_mean, running_var,
                         eps=1e-5, *, block_bytes=2 * 1024 * 1024):
    """x: (N, C, H, W); weight/bias/running_mean/running_var: (C,)."""
    N, C, H, W = x.shape
    cols = H * W
    itemsize = jnp.dtype(x.dtype).itemsize
    sub = _sublane_align(x.dtype)

    # Fold frozen stats (same math as the PyTorch forward, done in f32).
    scale = weight.astype(jnp.float32) * jax.lax.rsqrt(
        running_var.astype(jnp.float32) + eps)
    shift = bias.astype(jnp.float32) - running_mean.astype(jnp.float32) * scale

    parallel2 = pltpu.CompilerParams(
        dimension_semantics=("parallel", "parallel"))

    rem = cols % 128
    lane_waste = 0.0 if rem == 0 else (128 - rem) / cols

    if lane_waste <= 0.10:
        # ---------------- ROW path: (N*C, H*W), per-row params ----------------
        R = N * C
        x2d = x.reshape(R, cols)
        scale2d = jnp.tile(scale, N).reshape(R, 1)
        shift2d = jnp.tile(shift, N).reshape(R, 1)

        # Byte-budget tiles: full spatial extent when it fits, else a 128-aligned
        # lane tile; then spend the rest of the budget on sublane rows.
        if cols * itemsize * sub <= block_bytes:
            tc = cols
        else:
            tc = max(128, _round_down(block_bytes // (sub * itemsize), 128))
        rows_budget = max(sub, block_bytes // (tc * itemsize))
        tr = R if rows_budget >= R else _round_down(rows_budget, sub)

        grid = (pl.cdiv(R, tr), pl.cdiv(cols, tc))  # cols innermost -> params resident per row tile
        out2d = pl.pallas_call(
            _affine_kernel,
            out_shape=jax.ShapeDtypeStruct((R, cols), x.dtype),
            grid=grid,
            in_specs=[
                pl.BlockSpec((tr, tc), lambda i, j: (i, j)),
                pl.BlockSpec((tr, 1), lambda i, j: (i, 0)),
                pl.BlockSpec((tr, 1), lambda i, j: (i, 0)),
            ],
            out_specs=pl.BlockSpec((tr, tc), lambda i, j: (i, j)),
            compiler_params=parallel2,
        )(x2d, scale2d, shift2d)
        return out2d.reshape(N, C, H, W)

    # ------------- FLATTENED path: (N, C*H*W), lane-replicated params -------------
    L = C * cols
    x2d = x.reshape(N, L)
    scale_rep = jnp.repeat(scale, cols).reshape(1, L)
    shift_rep = jnp.repeat(shift, cols).reshape(1, L)

    if N * 128 * itemsize > block_bytes:  # pathological batch size
        tr = max(sub, _round_down(block_bytes // (128 * itemsize), sub))
    else:
        tr = N
    lanes_budget = max(128, block_bytes // (tr * itemsize))
    tl = L if lanes_budget >= L else _round_down(lanes_budget, 128)

    # Lane-tile axis outermost (rows innermost) -> replicated params are fetched
    # once per lane tile and reused across the batch rows.
    grid = (pl.cdiv(L, tl), pl.cdiv(N, tr))
    out2d = pl.pallas_call(
        _affine_kernel,
        out_shape=jax.ShapeDtypeStruct((N, L), x.dtype),
        grid=grid,
        in_specs=[
            pl.BlockSpec((tr, tl), lambda j, i: (i, j)),
            pl.BlockSpec((1, tl), lambda j, i: (0, j)),
            pl.BlockSpec((1, tl), lambda j, i: (0, j)),
        ],
        out_specs=pl.BlockSpec((tr, tl), lambda j, i: (i, j)),
        compiler_params=parallel2,
    )(x2d, scale_rep, shift_rep)
    return out2d.reshape(N, C, H, W)


def _reference(x, weight, bias, running_mean, running_var, eps=1e-5):
    C = weight.shape[0]
    w = weight.reshape(1, C, 1, 1).astype(jnp.float32)
    b = bias.reshape(1, C, 1, 1).astype(jnp.float32)
    rv = running_var.reshape(1, C, 1, 1).astype(jnp.float32)
    rm = running_mean.reshape(1, C, 1, 1).astype(jnp.float32)
    s = w * jax.lax.rsqrt(rv + eps)
    t = b - rm * s
    return (x.astype(jnp.float32) * s + t).astype(x.dtype)


if __name__ == "__main__":
    key = jax.random.PRNGKey(0)

    # (shape, dtype, block_bytes) -- small block_bytes cases force multi-tile
    # grids / edge blocks so both paths' tilings are exercised at small shapes.
    cases = [
        ((2, 4, 16, 16), jnp.float32, 2 * 1024 * 1024),  # row path, single block
        ((2, 8, 7, 7), jnp.float32, 2 * 1024 * 1024),     # flattened path (H*W=49)
        ((2, 20, 16, 16), jnp.float32, 32 * 1024),        # row path, row-tiled + edge rows
        ((1, 8, 33, 33), jnp.float32, 16 * 1024),         # row path, lane-tiled + edge lanes
        ((2, 24, 20, 20), jnp.float32, 64 * 1024),        # flattened path, lane-tiled + edge
        ((2, 16, 16, 16), jnp.bfloat16, 2 * 1024 * 1024), # bf16 (16-sublane alignment)
    ]

    for (shape, dtype, bb) in cases:
        N, C, H, W = shape
        key, kx, kw, kb, km, kv = jax.random.split(key, 6)
        x = jax.random.normal(kx, shape, dtype=jnp.float32).astype(dtype)

        weight = jnp.ones((C,), jnp.float32) + 0.1 * jax.random.normal(kw, (C,), jnp.float32)
        bias = 0.1 * jax.random.normal(kb, (C,), jnp.float32)
        running_mean = 0.1 * jax.random.normal(km, (C,), jnp.float32)
        running_var = jnp.ones((C,), jnp.float32) + 0.1 * jnp.abs(
            jax.random.normal(kv, (C,), jnp.float32))

        out = frozen_batch_norm_2d(x, weight, bias, running_mean, running_var,
                                   block_bytes=bb)
        out = jax.block_until_ready(out)

        ref = _reference(x, weight, bias, running_mean, running_var)
        tol = 1e-5 if dtype == jnp.float32 else 2e-2
        assert jnp.allclose(out.astype(jnp.float32), ref.astype(jnp.float32),
                            atol=tol, rtol=tol), f"mismatch at {shape} {dtype}"

    print("KERNEL_OK")
</pallas_src>

<mosaic_0001>
module attributes {stable_mosaic.version = 11 : i64} {
  func.func @_affine_kernel(%arg0: i32, %arg1: i32, %arg2: memref<8x256xf32, #tpu.memory_space<vmem>>, %arg3: memref<8x1xf32, #tpu.memory_space<vmem>>, %arg4: memref<8x1xf32, #tpu.memory_space<vmem>>, %arg5: memref<8x256xf32, #tpu.memory_space<vmem>>) attributes {dimension_semantics = [#tpu.dimension_semantics<parallel>, #tpu.dimension_semantics<parallel>], iteration_bounds = array<i64: 1, 1>, scalar_prefetch = 0 : i64, scratch_operands = 0 : i64, tpu.core_type = #tpu.core_type<tc>, window_params = [{transform_indices = @transform_0, window_bounds = array<i64: 8, 256>}, {transform_indices = @transform_1, window_bounds = array<i64: 8, 1>}, {transform_indices = @transform_2, window_bounds = array<i64: 8, 1>}, {transform_indices = @transform_3, window_bounds = array<i64: 8, 256>}]} {
    %c0 = arith.constant 0 : index
    %c0_0 = arith.constant 0 : index
    %0 = vector.load %arg2[%c0, %c0_0] : memref<8x256xf32, #tpu.memory_space<vmem>>, vector<8x256xf32>
    %c0_1 = arith.constant 0 : index
    %c0_2 = arith.constant 0 : index
    %1 = vector.load %arg3[%c0_1, %c0_2] : memref<8x1xf32, #tpu.memory_space<vmem>>, vector<8x1xf32>
    %2 = vector.broadcast %1 : vector<8x1xf32> to vector<8x256xf32>
    %3 = arith.mulf %0, %2 : vector<8x256xf32>
    %c0_3 = arith.constant 0 : index
    %c0_4 = arith.constant 0 : index
    %4 = vector.load %arg4[%c0_3, %c0_4] : memref<8x1xf32, #tpu.memory_space<vmem>>, vector<8x1xf32>
    %5 = vector.broadcast %4 : vector<8x1xf32> to vector<8x256xf32>
    %6 = arith.addf %3, %5 : vector<8x256xf32>
    %c0_5 = arith.constant 0 : index
    %c0_6 = arith.constant 0 : index
    %7 = vector.load %arg5[%c0_5, %c0_6] : memref<8x256xf32, #tpu.memory_space<vmem>>, vector<8x256xf32>
    tpu.vector_store %arg5[%c0_5, %c0_6], %6 {strides = array<i32>} : memref<8x256xf32, #tpu.memory_space<vmem>>, vector<8x256xf32>,
    return
  }
  func.func @transform_0(%arg0: i32, %arg1: i32) -> (i32, i32) {
    %c0_i32 = arith.constant 0 : i32
    return %arg0, %arg1 : i32, i32
  }
  func.func @transform_1(%arg0: i32, %arg1: i32) -> (i32, i32) {
    %c0_i32 = arith.constant 0 : i32
    %c0_i32_0 = arith.constant 0 : i32
    return %arg0, %c0_i32 : i32, i32
  }
  func.func @transform_2(%arg0: i32, %arg1: i32) -> (i32, i32) {
    %c0_i32 = arith.constant 0 : i32
    %c0_i32_0 = arith.constant 0 : i32
    return %arg0, %c0_i32 : i32, i32
  }
  func.func @transform_3(%arg0: i32, %arg1: i32) -> (i32, i32) {
    %c0_i32 = arith.constant 0 : i32
    return %arg0, %arg1 : i32, i32
  }
}

</mosaic_0001>

<llo_original>
// kernel: tile.0
$region0: #{tile.0}
  %s0 = inlined_call_operand.vmem [shape: f32[2,4], index: 0, kind: input, shape index: {}]
  %s1 = inlined_call_operand.vmem [shape: f32[8,1], index: 1, kind: output, shape index: {}]
  $region1: #{tile.0} parent=0
    #allocation0 [shape = 'u8[4096]{0}', space=vmem, size = 0x1000, scoped, tag = 'scoped mem for input reshape']
    %s3 = sshllo.u32 0, 2
    %v4 = vld [vmem:[%s0] sm:%s3]
    %5 = vst [vmem:[#allocation0] sm:%s3] %v4
    %v6 = vld [vmem:[#allocation0] sm:$0x3]
    %vm7 = vcmask 7168
    %8 = vst.msk [vmem:[%s1] ss:$4 sm:$0x3] %vm7, %v6
    %v9 = vld [vmem:[#allocation0] sm:$0x3]
    %10 = vrot.lane.b32.xlu0 %v9, 127
    %v11 = vpop.permute.xlu0 %10
    %vm12 = vcmask 7168
    %s13 = scalar_lea.vmem %s1, 1
    %14 = vst.msk [vmem:[%s13] ss:$4 sm:$0x3] %vm12, %v11
    %v15 = vld [vmem:[#allocation0] sm:$0x3]
    %16 = vrot.lane.b32.xlu0 %v15, 126
    %v17 = vpop.permute.xlu0 %16
    %vm18 = vcmask 7168
    %s19 = scalar_lea.vmem %s1, 2
    %20 = vst.msk [vmem:[%s19] ss:$4 sm:$0x3] %vm18, %v17
    %v21 = vld [vmem:[#allocation0] sm:$0x3]
    %22 = vrot.lane.b32.xlu0 %v21, 125
    %v23 = vpop.permute.xlu0 %22
    %vm24 = vcmask 7168
    %s25 = scalar_lea.vmem %s1, 3
    %26 = vst.msk [vmem:[%s25] ss:$4 sm:$0x3] %vm24, %v23

// kernel: tile.18
$region0: #{tile.18}
  #allocation0 [shape = 's32[1]{0}', space=sflag, size = 0x4, scoped, tag = 'scoped memory for tile.18']
  %s0 = inlined_call_operand.vmem [shape: f32[4], index: 0, kind: input, shape index: {}]
  %s1 = inlined_call_operand.vmem [shape: f32[2,4], index: 1, kind: output, shape index: {}]
  // Predicated region
  $region2: #{tile.18} parent=0 // pred_check
    _
  $region3: #{tile.18} parent=0 // pred_check_branch
    %3 = sbr.rel (0) target = $region5
  $region4: #{tile.18} parent=0 // pred_region
    _
  $region5: #{tile.18} parent=0 // pred_fallthru
    _
  %v4 = vld [vmem:[%s0] ss:$0 sm:$0xff]
  %5 = vst [vmem:[%s1] sm:$0x3] %v4

// kernel: frozen_batch_norm_2d.1
$region0: #{frozen_batch_norm_2d.1}
  #allocation0 [shape = 'u32[]', space=smem, size = 0x4, offset = 0x4, fixed_abs, tag = 'smem constant byte address 0x4 - core index']
  #allocation1 [shape = 'u32[144,128]{1,0:T(1,128)}', space=vmem, size = 0x12000, scoped, tag = 'internal scratch']
  %s0 = inlined_call_operand.vmem [shape: f32[8,256], index: 0, kind: input, shape index: {}]
  %s1 = inlined_call_operand.vmem [shape: f32[8,1], index: 1, kind: input, shape index: {}]
  %s2 = inlined_call_operand.vmem [shape: f32[8,1], index: 2, kind: input, shape index: {}]
  %s3 = inlined_call_operand.vmem [shape: f32[8,256], index: 3, kind: output, shape index: {}]
  %s4 = sld [smem:[#allocation0]]
  $region22: #{frozen_batch_norm_2d.1} parent=0
    _
  %s6 = ssub.s32 1, %s4
  %s7 = scalar_select 0, %s6, %s4
  // Predicated region
  $region2: #{frozen_batch_norm_2d.1} parent=0 // pred_check
    _
  $region3: #{frozen_batch_norm_2d.1} parent=0 // pred_check_branch
    %9 = sbr.rel (0) target = $region5
  $region4: #{frozen_batch_norm_2d.1} parent=0 // pred_region
    _
  $region5: #{frozen_batch_norm_2d.1} parent=0 // pred_fallthru
    _
  // Predicated region
  $region6: #{frozen_batch_norm_2d.1} parent=0 // pred_check
    _
  $region7: #{frozen_batch_norm_2d.1} parent=0 // pred_check_branch
    %11 = sbr.rel (0) target = $region9
  $region8: #{frozen_batch_norm_2d.1} parent=0 // pred_region
    _
  $region9: #{frozen_batch_norm_2d.1} parent=0 // pred_fallthru
    _
  // Predicated region
  $region10: #{frozen_batch_norm_2d.1} parent=0 // pred_check
    _
  $region11: #{frozen_batch_norm_2d.1} parent=0 // pred_check_branch
    %13 = sbr.rel (0) target = $region13
  $region12: #{frozen_batch_norm_2d.1} parent=0 // pred_region
    _
  $region13: #{frozen_batch_norm_2d.1} parent=0 // pred_fallthru
    _
  %v14 = vld [vmem:[%s0] sm:$0xff]
  %v15 = vld [vmem:[%s0 + $0x8] sm:$0xff]
  %v16 = vld [vmem:[%s1] sm:$0xff]
  %18 = vset.pattern.permute.xlu0 0
  %19 = vperm.xlu0 %18, %v16
  %v20 = vpop.permute.xlu0 %19
  %v22 = vmul.f32 %v14, %v20
  %v23 = vmul.f32 %v15, %v20
  %v24 = vld [vmem:[%s2] sm:$0xff]
  %26 = vset.pattern.permute.xlu0 0
  %27 = vperm.xlu0 %26, %v24
  %v28 = vpop.permute.xlu0 %27
  %v30 = vadd.f32 %v22, %v28
  %v31 = vadd.f32 %v23, %v28
  %32 = vst [vmem:[%s3] sm:$0xff] %v30
  %33 = vst [vmem:[%s3 + $0x8] sm:$0xff] %v31
  // Predicated region
  $region14: #{frozen_batch_norm_2d.1} parent=0 // pred_check
    _
  $region15: #{frozen_batch_norm_2d.1} parent=0 // pred_check_branch
    %35 = sbr.rel (0) target = $region17
  $region16: #{frozen_batch_norm_2d.1} parent=0 // pred_region
    _
  $region17: #{frozen_batch_norm_2d.1} parent=0 // pred_fallthru
    _
  // Predicated region
  $region18: #{frozen_batch_norm_2d.1} parent=0 // pred_check
    _
  $region19: #{frozen_batch_norm_2d.1} parent=0 // pred_check_branch
    %37 = sbr.rel (0) target = $region21
  $region20: #{frozen_batch_norm_2d.1} parent=0 // pred_region
    _
  $region21: #{frozen_batch_norm_2d.1} parent=0 // pred_fallthru
    _

</llo_original>
